<compile_context>
chip_gen: v6e
topology: v6e:2x2x1
jax: 0.10.0
libtpu: 0.0.40
codegen_flags: <defaults>
</compile_context>

<pallas_src>
import numpy as np
import jax
import jax.numpy as jnp
from jax.experimental import pallas as pl
from jax.experimental.pallas import tpu as pltpu

WINDOW_SIZE = 5                                   # 'rect' moving-average window
OUTPUT_CLASSES = 2
SLICE_LO, SLICE_HI = 300, 600                     # slice applied AFTER diff
PAD_L = (WINDOW_SIZE - 1) // 2                    # 'same' left padding (odd W)
OUT_LEN = SLICE_HI - SLICE_LO                     # 300 diff values feed the max
NEED_LO = SLICE_LO - PAD_L                        # first mean column touched (298)
NEED_HI = SLICE_HI + (WINDOW_SIZE - 1) - PAD_L    # last mean column touched (602)

LANES = 128
WIN_LO = (NEED_LO // LANES) * LANES               # 256: lane-aligned window start
WIN_BLOCKS = -(-(NEED_HI + 1 - WIN_LO) // LANES)  # 3 x 128-lane blocks loaded
WIN_LEN = WIN_BLOCKS * LANES                      # 384
BASE = NEED_LO - WIN_LO                           # 42: offset inside loaded window

MAX_BLOCK_BYTES = 8 << 20                         # target input bytes per buffer


# --------------------------------------------------------------------------
# Kernels
# --------------------------------------------------------------------------
def _finalize_store(acc_ref, o_ref, taps_nonzero):
    """Folded conv+diff taps over the running H-sum, then max -> (tb, C)."""
    s = acc_ref[...]                                          # (tb, WIN_LEN)
    j0, t0 = taps_nonzero[0]
    d = t0 * s[:, BASE + j0:BASE + j0 + OUT_LEN]
    for j, t in taps_nonzero[1:]:
        d = d + t * s[:, BASE + j:BASE + j + OUT_LEN]
    mx = jnp.max(d, axis=-1)                                  # method='max'
    o_ref[...] = jnp.broadcast_to(
        mx[:, None], o_ref.shape).astype(o_ref.dtype)         # expand(-1, C)


def _make_merged_kernel(taps_nonzero):
    """grid = (B tiles, H tiles); one (tb, th, 384) input block per step."""

    def kernel(x_ref, o_ref, acc_ref):
        h = pl.program_id(1)

        @pl.when(h == 0)
        def _():
            acc_ref[...] = jnp.zeros_like(acc_ref)

        # Cross-sublane reduce over the H tile (XLU); overlapped with the next
        # tile's DMA by the pipeline.  No MXU offload (HBM-bound kernel).
        acc_ref[...] += jnp.sum(x_ref[...].astype(jnp.float32), axis=1)

        @pl.when(h == pl.num_programs(1) - 1)
        def _():
            _finalize_store(acc_ref, o_ref, taps_nonzero)

    return kernel


def _make_split_kernel(taps_nonzero):
    """Fallback: grid = (B tiles, H tiles, 3); one 128-lane block per step."""

    def kernel(x_ref, o_ref, acc_ref):
        h = pl.program_id(1)
        l = pl.program_id(2)

        @pl.when((h == 0) & (l == 0))
        def _():
            acc_ref[...] = jnp.zeros_like(acc_ref)

        col = jnp.sum(x_ref[...].astype(jnp.float32), axis=1)    # (tb, 128)
        for lb in range(WIN_BLOCKS):                              # static slices
            @pl.when(l == lb)
            def _(lo=lb * LANES):
                acc_ref[:, lo:lo + LANES] += col

        @pl.when((h == pl.num_programs(1) - 1) & (l == pl.num_programs(2) - 1))
        def _():
            _finalize_store(acc_ref, o_ref, taps_nonzero)

    return kernel


# --------------------------------------------------------------------------
# Tiling / provisioning helpers
# --------------------------------------------------------------------------
def _device_kind():
    try:
        return jax.devices()[0].device_kind.lower()
    except Exception:
        return ""


def _choose_tiles(B, H, itemsize):
    """Grow th first (biggest lever), tb second; keep v7x megacore usable."""
    sub = 8 if itemsize >= 4 else (16 if itemsize == 2 else 32)   # sublane pack

    def ok_h(t):
        return H % t == 0 and (t % sub == 0 or t == H)

    def ok_b(t):
        return B % t == 0 and (t % 8 == 0 or t == B)

    th_cands = [t for t in range(1, min(H, 512) + 1) if ok_h(t)]
    th = max(th_cands) if th_cands else H

    row_bytes = th * WIN_LEN * itemsize
    tb_cap = max(8, MAX_BLOCK_BYTES // max(row_bytes, 1))
    tb_cands = [t for t in range(1, B + 1) if ok_b(t) and t <= tb_cap]
    if B >= 16:
        # Keep >= 2 batch blocks so the "parallel" axis shards across both
        # v7x TensorCores (v5e/v6e are unaffected).
        split = [t for t in tb_cands if B // t >= 2]
        if split:
            tb_cands = split
    tb = max(tb_cands) if tb_cands else B
    return tb, th


def _call(x, taps_nonzero, tb, th, n_buf, *, merged):
    B, H, L = x.shape
    itemsize = x.dtype.itemsize
    win_block = WIN_LO // LANES

    if merged:
        grid = (B // tb, H // th)
        block_shape = (tb, th, pl.Element(WIN_LEN))     # element offset 256
        in_index = lambda b, h: (b, h, WIN_LO)
        out_index = lambda b, h: (b, 0)
        kernel = _make_merged_kernel(taps_nonzero)
        dims = ("parallel", "arbitrary")
        block_bytes = tb * th * WIN_LEN * itemsize
    else:
        grid = (B // tb, H // th, WIN_BLOCKS)
        block_shape = (tb, th, LANES)
        in_index = lambda b, h, l: (b, h, l + win_block)
        out_index = lambda b, h, l: (b, 0)
        kernel = _make_split_kernel(taps_nonzero)
        dims = ("parallel", "arbitrary", "arbitrary")
        block_bytes = tb * th * LANES * itemsize

    spec_kwargs = {}
    if n_buf != 2:                                       # v7x: deeper pipelining
        spec_kwargs = dict(pipeline_mode=pl.Buffered(n_buf))
    in_spec = pl.BlockSpec(block_shape, in_index, **spec_kwargs)

    # VMEM budget: n_buf input buffers + f32 accumulator + padded output tile.
    vmem_need = n_buf * block_bytes + tb * WIN_LEN * 4 + tb * LANES * 4
    vmem_limit = int(min(max(vmem_need + (4 << 20), 16 << 20), 64 << 20))

    cost = pl.CostEstimate(
        flops=int(B * H * WIN_LEN + B * OUT_LEN * (2 * len(taps_nonzero) + 1)),
        transcendentals=0,
        bytes_accessed=int(B * H * WIN_LEN * itemsize + B * OUTPUT_CLASSES * 4),
    )

    return pl.pallas_call(
        kernel,
        out_shape=jax.ShapeDtypeStruct((B, OUTPUT_CLASSES), jnp.float32),
        grid_spec=pltpu.PrefetchScalarGridSpec(
            num_scalar_prefetch=0,
            grid=grid,
            in_specs=[in_spec],
            out_specs=pl.BlockSpec((tb, OUTPUT_CLASSES), out_index),
            scratch_shapes=[pltpu.VMEM((tb, WIN_LEN), jnp.float32)],
        ),
        compiler_params=pltpu.CompilerParams(
            dimension_semantics=dims,
            vmem_limit_bytes=vmem_limit),
        cost_estimate=cost,
    )(x)


# --------------------------------------------------------------------------
# Public wrapper
# --------------------------------------------------------------------------
def neural_metric(x_nchw, conv_weight, *, tb=None, th=None):
    """x_nchw: (B, 1, H, L); conv_weight: length-W window (fixed module buffer).

    Accepts f32 or bf16 inputs (accumulation is always f32)."""
    B, C, H, L = x_nchw.shape
    assert C == 1, "NeuralMetric conv1d expects a single input channel"
    # Lane-aligned fully-in-bounds window.
    # TODO(synk): module itself only needs L >= 603; add a short-sequence path
    # for 603 <= L < 640 where the aligned window would run off the end.
    assert L >= WIN_LO + WIN_LEN, f"time axis must be >= {WIN_LO + WIN_LEN}"

    x = x_nchw.reshape(B, H, L)               # squeeze channel dim (metadata only)

    # Fold 1/H (mean) and torch.diff into the conv taps:
    #   d[i] = sum_j (w[j-1] - w[j]) * mean[i-2+j]
    # conv_weight is a deterministic buffer of the module config (not learned),
    # so folded taps are compile-time constants; zero taps are pruned ('rect'
    # telescopes to (hsum[i+3] - hsum[i-2]) / (W*H)).
    w = np.asarray(jax.device_get(conv_weight), dtype=np.float64).reshape(-1)
    assert w.shape[0] == WINDOW_SIZE
    w_ext = np.concatenate([[0.0], w, [0.0]])
    taps = (w_ext[:-1] - w_ext[1:]) / float(H)            # length W+1
    taps_nonzero = [(j, float(t)) for j, t in enumerate(taps) if t != 0.0]
    if not taps_nonzero:
        taps_nonzero = [(0, 0.0)]

    itemsize = x.dtype.itemsize
    atb, ath = _choose_tiles(B, H, itemsize)
    tb = tb if tb is not None else atb
    th = th if th is not None else ath
    assert B % tb == 0 and (tb % 8 == 0 or tb == B), (B, tb)
    assert H % th == 0 and (th % 8 == 0 or th == H), (H, th)

    n_buf = 3 if "v7" in _device_kind() else 2             # Buffered(3) on v7x

    try:
        return _call(x, taps_nonzero, tb, th, n_buf, merged=True)
    except Exception:
        # TODO(synk): element-indexed (merged 384-lane) BlockSpec unavailable in
        # this Pallas build; fall back to the validated 3x128-lane blocked grid.
        return _call(x, taps_nonzero, tb, th, 2, merged=False)


def reference(x_nchw, conv_weight):
    """Pure-JAX re-implementation of the PyTorch forward (for verification)."""
    B, C, H, L = x_nchw.shape
    w = jnp.asarray(conv_weight, jnp.float32).reshape(-1)
    W = w.shape[0]
    m = x_nchw.astype(jnp.float32).mean(-2)                 # (B, 1, L)
    pad_l, pad_r = (W - 1) // 2, W // 2
    mp = jnp.pad(m, ((0, 0), (0, 0), (pad_l, pad_r)))
    y = sum(w[k] * mp[:, :, k:k + L] for k in range(W))     # conv1d 'same'
    d = y[:, :, 1:] - y[:, :, :-1]                          # torch.diff
    s = d[:, :, SLICE_LO:SLICE_HI]
    mx = s.max(-1)                                          # (B, 1)
    return jnp.broadcast_to(mx, (B, OUTPUT_CLASSES))


if __name__ == "__main__":
    key = jax.random.PRNGKey(0)
    B, H, L = 2, 16, 768                                    # small, L >= 640
    x = jax.random.normal(key, (B, 1, H, L), dtype=jnp.float32)

    # 'rect' window normalized to sum to 1 (as in NeuralMetric.__init__).
    conv_weight = np.ones((WINDOW_SIZE,), np.float32)
    conv_weight = conv_weight / conv_weight.sum()

    ref = reference(x, conv_weight)

    # Default tiling (single H tile) plus an explicit multi-H-tile split that
    # exercises the persistent-accumulator / pipelined path.
    for kwargs in ({}, {"th": 8}):
        out = jax.block_until_ready(neural_metric(x, conv_weight, **kwargs))
        assert out.shape == (B, OUTPUT_CLASSES), out.shape
        assert out.dtype == jnp.float32
        assert jnp.allclose(out, ref, rtol=1e-5, atol=1e-5), (kwargs, out, ref)

    print("KERNEL_OK")
</pallas_src>

<mosaic_0001>
module attributes {stable_mosaic.version = 11 : i64} {
  func.func @kernel(%arg0: i32, %arg1: i32, %arg2: i32, %arg3: memref<2x16x128xf32, #tpu.memory_space<vmem>>, %arg4: memref<2x2xf32, #tpu.memory_space<vmem>>, %arg5: memref<2x384xf32, #tpu.memory_space<vmem>>) attributes {dimension_semantics = [#tpu.dimension_semantics<parallel>, #tpu.dimension_semantics<arbitrary>, #tpu.dimension_semantics<arbitrary>], iteration_bounds = array<i64: 1, 1, 3>, scalar_prefetch = 0 : i64, scratch_operands = 1 : i64, tpu.core_type = #tpu.core_type<tc>, window_params = [{transform_indices = @transform_0, window_bounds = array<i64: 2, 16, 128>}, {transform_indices = @transform_1, window_bounds = array<i64: 2, 2>}]} {
    %c0_i32 = arith.constant 0 : i32
    %0 = arith.cmpi eq, %arg1, %c0_i32 : i32
    %c0_i32_0 = arith.constant 0 : i32
    %1 = arith.cmpi eq, %arg2, %c0_i32_0 : i32
    %2 = arith.andi %0, %1 : i1
    %3 = arith.extui %2 : i1 to i32
    %c0_i32_1 = arith.constant 0 : i32
    %4 = arith.cmpi ne, %3, %c0_i32_1 : i32
    scf.if %4 {
      %cst_11 = arith.constant 0.000000e+00 : f32
      %21 = vector.broadcast %cst_11 : f32 to vector<2x384xf32>
      %c0_12 = arith.constant 0 : index
      %c0_13 = arith.constant 0 : index
      %22 = vector.load %arg5[%c0_12, %c0_13] : memref<2x384xf32, #tpu.memory_space<vmem>>, vector<2x384xf32>
      tpu.vector_store %arg5[%c0_12, %c0_13], %21 {strides = array<i32>} : memref<2x384xf32, #tpu.memory_space<vmem>>, vector<2x384xf32>,
    } else {
    }
    %c0 = arith.constant 0 : index
    %c0_2 = arith.constant 0 : index
    %c0_3 = arith.constant 0 : index
    %5 = vector.load %arg3[%c0, %c0_2, %c0_3] : memref<2x16x128xf32, #tpu.memory_space<vmem>>, vector<2x16x128xf32>
    %cst = arith.constant dense<0.000000e+00> : vector<2x128xf32>
    %6 = vector.multi_reduction <add>, %5, %cst [1] : vector<2x16x128xf32> to vector<2x128xf32>
    %c0_i32_4 = arith.constant 0 : i32
    %7 = arith.cmpi eq, %arg2, %c0_i32_4 : i32
    %8 = arith.extui %7 : i1 to i32
    %c0_i32_5 = arith.constant 0 : i32
    %9 = arith.cmpi ne, %8, %c0_i32_5 : i32
    scf.if %9 {
      %c0_11 = arith.constant 0 : index
      %c0_12 = arith.constant 0 : index
      %21 = vector.load %arg5[%c0_11, %c0_12] : memref<2x384xf32, #tpu.memory_space<vmem>>, vector<2x128xf32>
      %22 = arith.addf %21, %6 : vector<2x128xf32>
      %c0_13 = arith.constant 0 : index
      %c0_14 = arith.constant 0 : index
      %23 = vector.load %arg5[%c0_13, %c0_14] : memref<2x384xf32, #tpu.memory_space<vmem>>, vector<2x128xf32>
      tpu.vector_store %arg5[%c0_13, %c0_14], %22 {strides = array<i32>} : memref<2x384xf32, #tpu.memory_space<vmem>>, vector<2x128xf32>,
    } else {
    }
    %c1_i32 = arith.constant 1 : i32
    %10 = arith.cmpi eq, %arg2, %c1_i32 : i32
    %11 = arith.extui %10 : i1 to i32
    %c0_i32_6 = arith.constant 0 : i32
    %12 = arith.cmpi ne, %11, %c0_i32_6 : i32
    scf.if %12 {
      %c0_11 = arith.constant 0 : index
      %c128 = arith.constant 128 : index
      %21 = vector.load %arg5[%c0_11, %c128] : memref<2x384xf32, #tpu.memory_space<vmem>>, vector<2x128xf32>
      %22 = arith.addf %21, %6 : vector<2x128xf32>
      %c0_12 = arith.constant 0 : index
      %c128_13 = arith.constant 128 : index
      %23 = vector.load %arg5[%c0_12, %c128_13] : memref<2x384xf32, #tpu.memory_space<vmem>>, vector<2x128xf32>
      tpu.vector_store %arg5[%c0_12, %c128_13], %22 {strides = array<i32>} : memref<2x384xf32, #tpu.memory_space<vmem>>, vector<2x128xf32>,
    } else {
    }
    %c2_i32 = arith.constant 2 : i32
    %13 = arith.cmpi eq, %arg2, %c2_i32 : i32
    %14 = arith.extui %13 : i1 to i32
    %c0_i32_7 = arith.constant 0 : i32
    %15 = arith.cmpi ne, %14, %c0_i32_7 : i32
    scf.if %15 {
      %c0_11 = arith.constant 0 : index
      %c256 = arith.constant 256 : index
      %21 = vector.load %arg5[%c0_11, %c256] : memref<2x384xf32, #tpu.memory_space<vmem>>, vector<2x128xf32>
      %22 = arith.addf %21, %6 : vector<2x128xf32>
      %c0_12 = arith.constant 0 : index
      %c256_13 = arith.constant 256 : index
      %23 = vector.load %arg5[%c0_12, %c256_13] : memref<2x384xf32, #tpu.memory_space<vmem>>, vector<2x128xf32>
      tpu.vector_store %arg5[%c0_12, %c256_13], %22 {strides = array<i32>} : memref<2x384xf32, #tpu.memory_space<vmem>>, vector<2x128xf32>,
    } else {
    }
    %c0_i32_8 = arith.constant 0 : i32
    %16 = arith.cmpi eq, %arg1, %c0_i32_8 : i32
    %c2_i32_9 = arith.constant 2 : i32
    %17 = arith.cmpi eq, %arg2, %c2_i32_9 : i32
    %18 = arith.andi %16, %17 : i1
    %19 = arith.extui %18 : i1 to i32
    %c0_i32_10 = arith.constant 0 : i32
    %20 = arith.cmpi ne, %19, %c0_i32_10 : i32
    scf.if %20 {
      %c0_11 = arith.constant 0 : index
      %c0_12 = arith.constant 0 : index
      %21 = vector.load %arg5[%c0_11, %c0_12] : memref<2x384xf32, #tpu.memory_space<vmem>>, vector<2x384xf32>
      %22 = vector.extract_strided_slice %21 {offsets = [0, 42], sizes = [2, 300], strides = [1, 1]} : vector<2x384xf32> to vector<2x300xf32>
      %cst_13 = arith.constant -1.250000e-02 : f32
      %23 = vector.broadcast %cst_13 : f32 to vector<2x300xf32>
      %24 = arith.mulf %23, %22 : vector<2x300xf32>
      %25 = vector.extract_strided_slice %21 {offsets = [0, 47], sizes = [2, 300], strides = [1, 1]} : vector<2x384xf32> to vector<2x300xf32>
      %cst_14 = arith.constant 1.250000e-02 : f32
      %26 = vector.broadcast %cst_14 : f32 to vector<2x300xf32>
      %27 = arith.mulf %26, %25 : vector<2x300xf32>
      %28 = arith.addf %24, %27 : vector<2x300xf32>
      %cst_15 = arith.constant dense<0xFF800000> : vector<2xf32>
      %29 = vector.multi_reduction <maximumf>, %28, %cst_15 [1] : vector<2x300xf32> to vector<2xf32>
      %30 = vector.shape_cast %29 : vector<2xf32> to vector<2x1xf32>
      %31 = vector.shape_cast %30 : vector<2x1xf32> to vector<2x1xf32>
      %32 = vector.broadcast %31 : vector<2x1xf32> to vector<2x2xf32>
      %c0_16 = arith.constant 0 : index
      %c0_17 = arith.constant 0 : index
      %33 = vector.load %arg4[%c0_16, %c0_17] : memref<2x2xf32, #tpu.memory_space<vmem>>, vector<2x2xf32>
      tpu.vector_store %arg4[%c0_16, %c0_17], %32 {strides = array<i32>} : memref<2x2xf32, #tpu.memory_space<vmem>>, vector<2x2xf32>,
    } else {
    }
    return
  }
  func.func @transform_0(%arg0: i32, %arg1: i32, %arg2: i32) -> (i32, i32, i32) {
    %c2_i32 = arith.constant 2 : i32
    %0 = arith.addi %arg2, %c2_i32 : i32
    %c0_i32 = arith.constant 0 : i32
    return %arg0, %arg1, %0 : i32, i32, i32
  }
  func.func @transform_1(%arg0: i32, %arg1: i32, %arg2: i32) -> (i32, i32) {
    %c0_i32 = arith.constant 0 : i32
    %c0_i32_0 = arith.constant 0 : i32
    return %arg0, %c0_i32 : i32, i32
  }
}

</mosaic_0001>

<llo_original>
// kernel: tpu_custom_call.1
$region0: #{tpu_custom_call.1}
  #allocation0 [shape = 'u32[]', space=smem, size = 0x4, offset = 0x4, fixed_abs, tag = 'smem constant byte address 0x4 - core index']
  #allocation1 [shape = 'u32[144,128]{1,0:T(1,128)}', space=vmem, size = 0x12000, scoped, tag = 'internal scratch']
  #allocation2 [shape = 'f32[2,384]{1,0:T(2,128)}', space=vmem, size = 0xc00, scoped, tag = 'scratch operand']
  %s0 = inlined_call_operand.hbm [shape: f32[2,16,768], index: 0, kind: input, shape index: {}]
  %s1 = inlined_call_operand.hbm [shape: f32[2,2], index: 1, kind: output, shape index: {}]
  %s2 = sld [smem:[#allocation0]]
  $region61: #{tpu_custom_call.1} parent=0
    _
  %s4 = ssub.s32 1, %s2
  %s5 = scalar_select 0, %s4, %s2
  $region1: #{tpu_custom_call.1} parent=0
    #allocation3 [shape = 'u8[32768]{0}', space=vmem, size = 0x8000, scoped, tag = 'input window, operand 0']
    #allocation4 [shape = 's32[2]{0}', space=sflag, size = 0x8, scoped, tag = 'scoped memory for tpu_custom_call.1']
    #allocation5 [shape = 's32[2]{0}', space=sflag, size = 0x8, scoped, tag = 'scoped memory for tpu_custom_call.1']
    #allocation6 [shape = 'u8[1024]{0}', space=vmem, size = 0x400, scoped, tag = 'output window, operand 0, single buffered']
    %6 = vsyncpa [#allocation4], 0
    %s7 = scalar_lea.sflag [#allocation4], 1
    %8 = vsyncpa %s7, 0
    %9 = vsyncpa [#allocation5], 0
    loop: start=0, step=1, limit=5
    $region2: #{tpu_custom_call.1} parent=1 // loop_pre_header
      _
    $region3: #{tpu_custom_call.1} parent=1 // loop_header
      %s11 = sphi 0, %s15
      %p12 = scmp.ge.s32.totalorder %s11, 5
      %s18 = sphi 0, %s37
      %s19 = sphi 0, %s33
      %s20 = sphi 0, %s29
      %s21 = sphi 0, %s18
      %s22 = sphi 0, %s19
      %s23 = sphi 0, %s20
      %s24 = sphi 0, %s21
      %s25 = sphi 0, %s22
      %s26 = sphi 0, %s23
      %s46 = sphi 0, %s48
      %s49 = sphi 0, %s46
      %s50 = sphi 0, %s49
      %s66 = sphi 0, %s50
      %s72 = sphi 0, %s74
      %s75 = sphi 0, %s72
      %s76 = sphi 0, %s75
      %s92 = sphi 0, %s76
    $region4: #{tpu_custom_call.1} parent=1 // loop_header_branch
      %14 = sbr.rel (%p12) target = $region8
    $region5: #{tpu_custom_call.1} parent=1 // loop_body
      %s16 = ssub.s32 %s11, 1
      %s17 = ssub.s32 %s11, 2
      %s27 = sadd.s32 1, %s20
      %p28 = scmp.ge.s32.totalorder %s27, 3
      %s29 = scalar_select %p28, 0, %s27
      %s30 = sadd.s32 1, %s19
      %s31 = scalar_select %p28, %s30, %s19
      %p32 = scmp.ge.s32.totalorder %s31, 1
      %s33 = scalar_select %p32, 0, %s31
      %s34 = sadd.s32 1, %s18
      %s35 = scalar_select %p32, %s34, %s18
      %p36 = scmp.ge.s32.totalorder %s35, 1
      %s37 = scalar_select %p36, 0, %s35
      %s38 = sadd.s32 %s20, 2
      %s39 = sadd.s32 %s29, 2
      %s40 = ssub.s32 %s18, %s37
      %s41 = ssub.s32 %s19, %s33
      %s42 = sor.u32 %s40, %s41
      %s43 = ssub.s32 %s38, %s39
      %s44 = sor.u32 %s42, %s43
      %p45 = scmp.eq.s32.totalorder %s44, 0
      %s47 = sadd.s32 %s46, 1
      %s48 = scalar_select %p45, %s46, %s47
      %p51 = pneg %p45
      %p52 = scmp.eq.s32.totalorder %s11, 2
      %p53 = por %p51, %p52
      %p54 = scmp.ne.s32.totalorder %s46, %s49
      %p55 = scmp.eq.s32.totalorder %s11, 0
      %p56 = por %p54, %p55
      %p57 = scmp.ne.s32.totalorder %s46, %s49
      %p58 = scmp.eq.s32.totalorder %s16, 2
      %p59 = por %p57, %p58
      %p60 = scmp.ne.s32.totalorder %s49, %s50
      %p61 = scmp.eq.s32.totalorder %s16, 0
      %p62 = por %p60, %p61
      %p63 = scmp.ne.s32.totalorder %s49, %s50
      %p64 = scmp.eq.s32.totalorder %s17, 2
      %p65 = por %p63, %p64
      %p67 = scmp.ne.s32.totalorder %s50, %s66
      %p68 = scmp.eq.s32.totalorder %s17, 0
      %p69 = por %p67, %p68
      %s70 = ssub.s32 %s18, %s37
      %p71 = scmp.eq.s32.totalorder %s70, 0
      %s73 = sadd.s32 %s72, 1
      %s74 = scalar_select %p71, %s72, %s73
      %p77 = pneg %p71
      %p78 = scmp.eq.s32.totalorder %s11, 2
      %p79 = por %p77, %p78
      %p80 = scmp.ne.s32.totalorder %s72, %s75
      %p81 = scmp.eq.s32.totalorder %s11, 0
      %p82 = por %p80, %p81
      %p83 = scmp.ne.s32.totalorder %s72, %s75
      %p84 = scmp.eq.s32.totalorder %s16, 2
      %p85 = por %p83, %p84
      %p86 = scmp.ne.s32.totalorder %s75, %s76
      %p87 = scmp.eq.s32.totalorder %s16, 0
      %p88 = por %p86, %p87
      %p89 = scmp.ne.s32.totalorder %s75, %s76
      %p90 = scmp.eq.s32.totalorder %s17, 2
      %p91 = por %p89, %p90
      %p93 = scmp.ne.s32.totalorder %s76, %s92
      %p94 = scmp.eq.s32.totalorder %s17, 0
      %p95 = por %p93, %p94
      %p96 = scmp.le.s32.totalorder 1, %s11
      %p97 = scmp.lt.s32.totalorder %s11, 4
      %p98 = pnand %p96, %p97
      %p99 = pneg %p98
      // Predicated region
      $region9: #{tpu_custom_call.1} parent=5 // pred_check
        _
      $region10: #{tpu_custom_call.1} parent=5 // pred_check_branch
        %101 = sbr.rel (%p98) target = $region12
      $region11: #{tpu_custom_call.1} parent=5 // pred_region
        %s102 = ssub.s32 %s11, 1
      $region12: #{tpu_custom_call.1} parent=5 // pred_fallthru
        _
      %p103 = scmp.lt.s32.totalorder %s11, 3
      // Predicated region
      $region13: #{tpu_custom_call.1} parent=5 // pred_check
        %p104 = pneg %p103
      $region14: #{tpu_custom_call.1} parent=5 // pred_check_branch
        %106 = sbr.rel (%p104) target = $region16
      $region15: #{tpu_custom_call.1} parent=5 // pred_region
        // Predicated region
        $region17: #{tpu_custom_call.1} parent=15 // pred_check
          %p107 = pneg %p56
        $region18: #{tpu_custom_call.1} parent=15 // pred_check_branch
          %109 = sbr.rel (%p107) target = $region20
        $region19: #{tpu_custom_call.1} parent=15 // pred_region
          %s110 = sand.u32 %s46, 1
          %s111 = scalar_lea.sflag [#allocation4], %s110
          %s112 = sand.u32 %s46, 1
          %s113 = smul.addr %s112, 32
          %s114 = scalar_lea.vmem [#allocation3], %s113
          %s115 = sadd.s32 %s20, 2
          %s116 = smul.u32 2, %s18
          %s117 = smul.u32 2, %s19
          %s119 = ssub.s32 512, 512
          %120 = vsyncadd %s111, %s119
          %s121 = smul.addr %s117, 6
          %s122 = sadd.s32 %s115, %s121
          %s123 = smul.addr %s116, 12
          %s124 = sadd.s32 %s122, %s123
          %s125 = smul.addr %s124, 128
          %s126 = scalar_lea.hbm %s0, %s125
          %s127 = sshll.u32 %s114, 4
          %s128 = int_to_ptr.vmem [resolvable:$true] %s127
          %133 = dma.hbm_to_vmem [thread:$0]  %s126, 512, %s128, %s111, 768, 128, 8
        $region20: #{tpu_custom_call.1} parent=15 // pred_fallthru
          _
      $region16: #{tpu_custom_call.1} parent=5 // pred_fallthru
        _
      %p134 = scmp.le.s32.totalorder 1, %s11
      %p135 = scmp.lt.s32.totalorder %s11, 4
      %p136 = pnand %p134, %p135
      %p137 = pneg %p136
      // Predicated region
      $region21: #{tpu_custom_call.1} parent=5 // pred_check
        _
      $region22: #{tpu_custom_call.1} parent=5 // pred_check_branch
        %139 = sbr.rel (%p136) target = $region24
      $region23: #{tpu_custom_call.1} parent=5 // pred_region
        %s140 = ssub.s32 %s11, 1
        %s141 = sand.u32 %s49, 1
        %s142 = scalar_lea.sflag [#allocation4], %s141
        %s143 = sand.u32 %s49, 1
        %s144 = smul.addr %s143, 32
        %s145 = scalar_lea.vmem [#allocation3], %s144
        // Predicated region
        $region25: #{tpu_custom_call.1} parent=23 // pred_check
          %p146 = pneg %p62
        $region26: #{tpu_custom_call.1} parent=23 // pred_check_branch
          %148 = sbr.rel (%p146) target = $region28
        $region27: #{tpu_custom_call.1} parent=23 // pred_region
          %149 = dma.done %s142, 512
        $region28: #{tpu_custom_call.1} parent=23 // pred_fallthru
          _
        %s150 = sand.u32 %s49, 1
        %s151 = scalar_lea.sflag [#allocation4], %s150
        %s152 = sand.u32 %s49, 1
        %s153 = smul.addr %s152, 32
        %s154 = scalar_lea.vmem [#allocation3], %s153
        %p155 = pneg %p62
        %p156 = pneg %p59
        %p157 = pneg %p88
        %p158 = pneg %p85
        %s159 = sadd.s32 %s23, 2
        %s160 = smul.u32 2, %s21
        %s161 = smul.u32 2, %s22
        %p162 = scmp.eq.s32.totalorder %s22, 0
        %p163 = scmp.eq.s32.totalorder %s23, 0
        %p164 = pnand %p162, %p163
        %p165 = pneg %p164
        // Predicated region
        $region29: #{tpu_custom_call.1} parent=23 // pred_check
          _
        $region30: #{tpu_custom_call.1} parent=23 // pred_check_branch
          %167 = sbr.rel (%p164) target = $region32
        $region31: #{tpu_custom_call.1} parent=23 // pred_region
          %168 = vst [vmem:[#allocation2] sm:$0x3f] 0.0
        $region32: #{tpu_custom_call.1} parent=23 // pred_fallthru
          _
        %v169 = vld [vmem:[%s145] sm:$0xff]
        %v170 = vld [vmem:[%s145 + $0x8] sm:$0xff]
        %v171 = vld [vmem:[%s145 + $0x10] sm:$0xff]
        %v172 = vld [vmem:[%s145 + $0x18] sm:$0xff]
        %v173 = vadd.f32 %v169, %v170
        %v174 = vrot.slane %v173, 4
        %v175 = vadd.f32 %v173, %v174
        %v176 = vrot.slane %v175, 2
        %v177 = vadd.f32 %v175, %v176
        %v178 = vrot.slane %v177, 1
        %v179 = vadd.f32 %v177, %v178
        %v180 = vadd.f32 %v171, %v172
        %v181 = vrot.slane %v180, 4
        %v182 = vadd.f32 %v180, %v181
        %v183 = vrot.slane %v182, 2
        %v184 = vadd.f32 %v182, %v183
        %v185 = vrot.slane %v184, 1
        %v186 = vadd.f32 %v184, %v185
        // Predicated region
        $region33: #{tpu_custom_call.1} parent=23 // pred_check
          %p187 = pneg %p163
        $region34: #{tpu_custom_call.1} parent=23 // pred_check_branch
          %189 = sbr.rel (%p187) target = $region36
        $region35: #{tpu_custom_call.1} parent=23 // pred_region
          %v190 = vld [vmem:[#allocation2] sm:$0x3]
          %v194 = vunpack.c.l.s4 1983009808
          %v195 = vunpack.c.0.s8 %v194
          %v196 = vlaneseq
          %v197 = vshrl.u32 %v196, 7
          %v198 = vsub.s32 %v195, %v197
          %v199 = vrot.slane %v179, %v198
          %v201 = vunpack.c.l.s4 1983009808
          %v202 = vunpack.c.0.s8 %v201
          %v203 = vlaneseq
          %v204 = vshrl.u32 %v203, 7
          %v205 = vsub.s32 %v202, %v204
          %v206 = vrot.slane %v186, %v205
          %vm207 = vcmask 1044484
          %v208 = vsel %vm207, %v199, %v199
          %vm209 = vcmask 1046534
          %v210 = vsel %vm209, %v199, %v208
          %v211 = vrot.slane %v206, 7
          %vm212 = vcmask 1041409
          %v213 = vsel %vm212, %v211, %v210
          %vm214 = vcmask 1043459
          %v215 = vsel %vm214, %v211, %v213
          %vm216 = vcmask 1045509
          %v217 = vsel %vm216, %v211, %v215
          %vm218 = vcmask 1047559
          %v219 = vsel %vm218, %v211, %v217
          %v221 = vadd.f32 %v190, %v219
          %222 = vst [vmem:[#allocation2] sm:$0x3] %v221
        $region36: #{tpu_custom_call.1} parent=23 // pred_fallthru
          _
        %p223 = scmp.eq.s32.totalorder %s23, 1
        // Predicated region
        $region37: #{tpu_custom_call.1} parent=23 // pred_check
          %p224 = pneg %p223
        $region38: #{tpu_custom_call.1} parent=23 // pred_check_branch
          %226 = sbr.rel (%p224) target = $region40
        $region39: #{tpu_custom_call.1} parent=23 // pred_region
          %v227 = vld [vmem:[#allocation2 + $0x2] sm:$0x3]
          %v231 = vunpack.c.l.s4 1983009808
          %v232 = vunpack.c.0.s8 %v231
          %v233 = vlaneseq
          %v234 = vshrl.u32 %v233, 7
          %v235 = vsub.s32 %v232, %v234
          %v236 = vrot.slane %v179, %v235
          %v238 = vunpack.c.l.s4 1983009808
          %v239 = vunpack.c.0.s8 %v238
          %v240 = vlaneseq
          %v241 = vshrl.u32 %v240, 7
          %v242 = vsub.s32 %v239, %v241
          %v243 = vrot.slane %v186, %v242
          %vm244 = vcmask 1044484
          %v245 = vsel %vm244, %v236, %v236
          %vm246 = vcmask 1046534
          %v247 = vsel %vm246, %v236, %v245
          %v248 = vrot.slane %v243, 7
          %vm249 = vcmask 1041409
          %v250 = vsel %vm249, %v248, %v247
          %vm251 = vcmask 1043459
          %v252 = vsel %vm251, %v248, %v250
          %vm253 = vcmask 1045509
          %v254 = vsel %vm253, %v248, %v252
          %vm255 = vcmask 1047559
          %v256 = vsel %vm255, %v248, %v254
          %v258 = vadd.f32 %v227, %v256
          %259 = vst [vmem:[#allocation2 + $0x2] sm:$0x3] %v258
        $region40: #{tpu_custom_call.1} parent=23 // pred_fallthru
          _
        %p260 = scmp.eq.s32.totalorder %s23, 2
        // Predicated region
        $region41: #{tpu_custom_call.1} parent=23 // pred_check
          %p261 = pneg %p260
        $region42: #{tpu_custom_call.1} parent=23 // pred_check_branch
          %263 = sbr.rel (%p261) target = $region44
        $region43: #{tpu_custom_call.1} parent=23 // pred_region
          %v264 = vld [vmem:[#allocation2 + $0x4] sm:$0x3]
          %v268 = vunpack.c.l.s4 1983009808
          %v269 = vunpack.c.0.s8 %v268
          %v270 = vlaneseq
          %v271 = vshrl.u32 %v270, 7
          %v272 = vsub.s32 %v269, %v271
          %v273 = vrot.slane %v179, %v272
          %v275 = vunpack.c.l.s4 1983009808
          %v276 = vunpack.c.0.s8 %v275
          %v277 = vlaneseq
          %v278 = vshrl.u32 %v277, 7
          %v279 = vsub.s32 %v276, %v278
          %v280 = vrot.slane %v186, %v279
          %vm281 = vcmask 1044484
          %v282 = vsel %vm281, %v273, %v273
          %vm283 = vcmask 1046534
          %v284 = vsel %vm283, %v273, %v282
          %v285 = vrot.slane %v280, 7
          %vm286 = vcmask 1041409
          %v287 = vsel %vm286, %v285, %v284
          %vm288 = vcmask 1043459
          %v289 = vsel %vm288, %v285, %v287
          %vm290 = vcmask 1045509
          %v291 = vsel %vm290, %v285, %v289
          %vm292 = vcmask 1047559
          %v293 = vsel %vm292, %v285, %v291
          %v295 = vadd.f32 %v264, %v293
          %296 = vst [vmem:[#allocation2 + $0x4] sm:$0x3] %v295
        $region44: #{tpu_custom_call.1} parent=23 // pred_fallthru
          _
        %p297 = pnand %p162, %p260
        %p298 = pneg %p297
        // Predicated region
        $region45: #{tpu_custom_call.1} parent=23 // pred_check
          _
        $region46: #{tpu_custom_call.1} parent=23 // pred_check_branch
          %300 = sbr.rel (%p297) target = $region48
        $region47: #{tpu_custom_call.1} parent=23 // pred_region
          %v301 = vld [vmem:[#allocation2] sm:$0x3f]
          %v302 = vmul.f32 %v301, -0.0125
          %v303 = vmul.f32 %v301, 0.0125
          %305 = vrot.lane.b32.xlu0 %v303, 123
          %v306 = vpop.permute.xlu0 %305
          %v307 = vrot.slane %v306, 2
          %vm308 = vcmask 1006592
          %v309 = vsel %vm308, %v306, %v307
          %v311 = vadd.f32 %v302, %v309
          %v313 = vcombine.high %v311, %v311
          %v315 = vunpack.c.l.s4 1983009808
          %v316 = vunpack.c.0.s8 %v315
          %v317 = vlaneseq
          %v318 = vshrl.u32 %v317, 7
          %v319 = vsub.s32 %v316, %v318
          %v320 = vrot.slane %v311, %v319
          %v322 = vunpack.c.l.s4 1983009808
          %v323 = vunpack.c.0.s8 %v322
          %v324 = vlaneseq
          %v325 = vshrl.u32 %v324, 7
          %v326 = vsub.s32 %v323, %v325
          %v327 = vrot.slane %v313, %v326
          %v328 = vcombine.high %v320, %v320
          %vm332 = vcmask 1041744
          %v333 = vsel %vm332, %v320, -inf
          %vm334 = vcmask 1041408
          %v335 = vsel %vm334, %v328, -inf
          %vm336 = vcmask 697344
          %v337 = vsel %vm336, %v327, -inf
          %v338 = vmax.f32 %v333, %v335
          %v339 = vmax.f32 %v338, %v337
          %340 = vmax.xlane.f32.xlu0 %v339
          %v341 = vpop.xlane.xlu0 %340
          %vm342 = vcmask 9216
          %343 = vst.msk [vmem:[#allocation6] sm:$0x3] %vm342, %v341
        $region48: #{tpu_custom_call.1} parent=23 // pred_fallthru
          _
        // Predicated region
        $region49: #{tpu_custom_call.1} parent=23 // pred_check
          %p344 = pneg %p85
        $region50: #{tpu_custom_call.1} parent=23 // pred_check_branch
          %346 = sbr.rel (%p344) target = $region52
        $region51: #{tpu_custom_call.1} parent=23 // pred_region
          %s348 = ssub.s32 32, 32
          %349 = vsyncadd [#allocation5], %s348
          %s350 = smul.addr %s21, 32
          %s351 = scalar_lea.hbm %s1, %s350
          %s353 = sshll.u32 [#allocation6], 4
          %s354 = int_to_ptr.vmem [resolvable:$true] %s353
          %356 = dma.vmem_to_hbm [thread:$0]  %s354, 32, %s351, [#allocation5]
        $region52: #{tpu_custom_call.1} parent=23 // pred_fallthru
          _
        // Predicated region
        $region53: #{tpu_custom_call.1} parent=23 // pred_check
          %p357 = pneg %p85
        $region54: #{tpu_custom_call.1} parent=23 // pred_check_branch
          %359 = sbr.rel (%p357) target = $region56
        $region55: #{tpu_custom_call.1} parent=23 // pred_region
          %360 = dma.done [#allocation5], 32
        $region56: #{tpu_custom_call.1} parent=23 // pred_fallthru
          _
      $region24: #{tpu_custom_call.1} parent=5 // pred_fallthru
        _
      %p361 = scmp.le.s32.totalorder 2, %s11
      // Predicated region
      $region57: #{tpu_custom_call.1} parent=5 // pred_check
        %p362 = pneg %p361
      $region58: #{tpu_custom_call.1} parent=5 // pred_check_branch
        %364 = sbr.rel (%p362) target = $region60
      $region59: #{tpu_custom_call.1} parent=5 // pred_region
        %s365 = ssub.s32 %s11, 2
      $region60: #{tpu_custom_call.1} parent=5 // pred_fallthru
        _
    $region6: #{tpu_custom_call.1} parent=1 // loop_footer
      %s15 = sadd.s32 1, %s11
    $region7: #{tpu_custom_call.1} parent=1 // loop_footer_branch
      %10 = sbr.rel target = $region3
    $region8: #{tpu_custom_call.1} parent=1 // loop_exit
      _
    %366 = vsyncpa [#allocation4], 1
    %s367 = scalar_lea.sflag [#allocation4], 1
    %368 = vsyncpa %s367, 1
    %369 = vsyncpa [#allocation5], 1
    %s370 = scalar_lea.sflag [#allocation5], 1
    %371 = vsyncpa %s370, 1

</llo_original>
